<compile_context>
chip_gen: v6e
topology: v6e:2x2x1
jax: 0.10.0
libtpu: 0.0.40
codegen_flags: <defaults>
</compile_context>

<pallas_src>
import functools
import math

import jax
import jax.numpy as jnp
from jax.experimental import pallas as pl
from jax.experimental.pallas import tpu as pltpu


_NEG_BIG = -1.0e30  # finite "-inf": keeps fully-masked rows NaN-free


def _round_down(x, m):
    return (x // m) * m


def _attention_kernel(q_ref, v_ref, w_ref, b_ref, *rest, inv_temp, has_mask):
    if has_mask:
        mask_ref, out_ref, attn_ref = rest
    else:
        out_ref, attn_ref = rest

    # pointer: Linear(query) on the MXU, f32 accumulation; the 1/sqrt(key_size)
    # scale is folded into proj (touches tb*V elements, not tb*N).
    proj = jnp.dot(q_ref[...], w_ref[...], preferred_element_type=jnp.float32)
    proj = (proj + b_ref[...]) * inv_temp                                # (tb, V)

    # Single bf16 copy of the values block, reused by both MXU contractions
    # (no (tb, N, V) f32 temporaries are materialized).
    v_bf = v_ref[...].astype(jnp.bfloat16)                               # (tb, N, V)

    # pointer logits: batched (1, V) x (N, V)^T matvec on the MXU.
    logits = jnp.einsum(
        'bqv,bnv->bqn', proj.astype(jnp.bfloat16)[:, None, :], v_bf,
        preferred_element_type=jnp.float32)[:, 0, :]                     # (tb, N)

    if has_mask:
        # torch masked_fill(-inf); finite fill so fully-masked rows stay NaN-free.
        logits = jnp.where(mask_ref[...] != 0, _NEG_BIG, logits)

    # softmax over the values axis (f32 VPU/EUP math, exact normalization).
    m = jnp.max(logits, axis=-1, keepdims=True)
    e = jnp.exp(logits - m)
    attn = e / jnp.sum(e, axis=-1, keepdims=True)                        # (tb, N)

    # output = bmm(attn.unsqueeze(1), values): batched (1, N) x (N, V) on the MXU.
    out = jnp.einsum(
        'bqn,bnv->bqv', attn.astype(jnp.bfloat16)[:, None, :], v_bf,
        preferred_element_type=jnp.float32)[:, 0, :]                     # (tb, V)

    attn_ref[...] = attn.astype(attn_ref.dtype)
    out_ref[...] = out.astype(out_ref.dtype)


def attention(query, values, weight, bias, attn_mask=None):
    """query: (B, Q), values: (B, N, V), weight: (Q, V) (= torch weight.T), bias: (V,).

    Returns (output (B, V) f32, attn (B, N) f32), matching the PyTorch module.
    """
    B, Q = query.shape
    Bv, N, V = values.shape
    assert Bv == B
    assert weight.shape == (Q, V) and bias.shape == (V,)
    inv_temp = 1.0 / math.sqrt(float(V))
    has_mask = attn_mask is not None

    # ---- VMEM-aware batch-tile sizing (no HBM padding/copies of `values`) ----
    try:
        vmem_cap = int(pltpu.get_tpu_info().vmem_capacity_bytes)
    except Exception:  # conservative v7x-safe default
        vmem_cap = 64 * 1024 * 1024
    budget = (vmem_cap * 3) // 5                       # headroom for Mosaic scratch
    vmem_limit = min((vmem_cap * 3) // 4, 128 * 1024 * 1024)

    v_bytes = jnp.dtype(values.dtype).itemsize
    q_bytes = jnp.dtype(query.dtype).itemsize
    per_row = N * V * (2 * v_bytes + 2)                # double-buffered values DMA + one bf16 copy
    per_row += 2 * Q * q_bytes                         # query (double-buffered)
    per_row += 2 * 4 * (V + N)                         # out / attn output blocks (double-buffered)
    per_row += 8 * (V + N)                             # proj / logits / softmax temporaries
    if has_mask:
        per_row += 2 * N                               # int8 mask (double-buffered)

    tb_budget = budget // max(per_row, 1)
    if B >= 64 and tb_budget >= 32:
        # Large batch: 32-row multiples (f32/bf16/int8 sublane packing), >=2 grid
        # steps (v7x megacore + DMA/compute overlap), <=128 rows per step.
        tb = min(_round_down(tb_budget, 32), 128, max(32, _round_down(B // 2, 32)))
    elif B <= max(tb_budget, 8):
        tb = B                                         # whole batch resident, grid = 1
    else:
        # TODO(synk): tile the N axis (two-pass / online softmax) when even an
        # 8-row (8, N, V) values block overflows the VMEM budget.
        tb = min(B, max(8, _round_down(tb_budget, 8)))
    grid_b = pl.cdiv(B, tb)

    weight_f32 = weight.astype(jnp.float32)
    bias_f32 = bias.astype(jnp.float32).reshape(1, V)

    inputs = [query, values, weight_f32, bias_f32]
    in_specs = [
        pl.BlockSpec((tb, Q), lambda i: (i, 0)),
        pl.BlockSpec((tb, N, V), lambda i: (i, 0, 0)),   # full N, V: no padding, no copy
        pl.BlockSpec((Q, V), lambda i: (0, 0)),          # weight: VMEM-resident
        pl.BlockSpec((1, V), lambda i: (0, 0)),          # bias:   VMEM-resident
    ]
    if has_mask:
        inputs.append(attn_mask.astype(jnp.int8))        # 1 B/elem, no padded copy
        in_specs.append(pl.BlockSpec((tb, N), lambda i: (i, 0)))

    kernel = functools.partial(_attention_kernel, inv_temp=inv_temp, has_mask=has_mask)

    cost = pl.CostEstimate(
        flops=2 * B * Q * V + 4 * B * N * V,
        transcendentals=B * N,
        bytes_accessed=B * N * V * v_bytes + B * Q * q_bytes + (Q * V + V) * 4
        + (B * V + B * N) * 4 + (B * N if has_mask else 0),
    )

    out, attn = pl.pallas_call(
        kernel,
        out_shape=(jax.ShapeDtypeStruct((B, V), jnp.float32),
                   jax.ShapeDtypeStruct((B, N), jnp.float32)),
        grid_spec=pltpu.PrefetchScalarGridSpec(
            num_scalar_prefetch=0,
            grid=(grid_b,),
            in_specs=in_specs,
            out_specs=(pl.BlockSpec((tb, V), lambda i: (i, 0)),
                       pl.BlockSpec((tb, N), lambda i: (i, 0))),
        ),
        compiler_params=pltpu.CompilerParams(
            dimension_semantics=("parallel",),
            vmem_limit_bytes=vmem_limit,
        ),
        cost_estimate=cost,
    )(*inputs)
    return out, attn


def attention_ref(query, values, weight, bias, attn_mask=None):
    """Pure-JAX f32 reference mirroring the PyTorch forward pass."""
    V = values.shape[-1]
    proj = query @ weight + bias
    logits = jnp.einsum('bnv,bv->bn', values, proj) / math.sqrt(float(V))
    if attn_mask is not None:
        logits = jnp.where(attn_mask != 0, -jnp.inf, logits)
    attn = jax.nn.softmax(logits, axis=-1)
    out = jnp.einsum('bn,bnv->bv', attn, values)
    return out, attn


if __name__ == "__main__":
    B, N, Q, V = 2, 8, 32, 32   # batch, num_values, query_size, value/key size

    key = jax.random.PRNGKey(0)
    k_q, k_v, k_w, k_b, k_m = jax.random.split(key, 5)

    query = jax.random.normal(k_q, (B, Q), dtype=jnp.float32)
    values = jax.random.normal(k_v, (B, N, V), dtype=jnp.float32)
    bound = 1.0 / math.sqrt(Q)
    weight = jax.random.uniform(k_w, (Q, V), minval=-bound, maxval=bound,
                                dtype=jnp.float32)   # stored as (in, out)
    bias = jax.random.uniform(k_b, (V,), minval=-bound, maxval=bound,
                              dtype=jnp.float32)

    # Unmasked path (specialized kernel variant without a mask ref).
    out, attn = attention(query, values, weight, bias, attn_mask=None)
    jax.block_until_ready((out, attn))
    out_r, attn_r = attention_ref(query, values, weight, bias, attn_mask=None)
    assert out.shape == (B, V) and attn.shape == (B, N)
    assert jnp.allclose(out, out_r, atol=5e-2, rtol=5e-2)
    assert jnp.allclose(attn, attn_r, atol=5e-2, rtol=5e-2)
    assert jnp.allclose(jnp.sum(attn, axis=-1), 1.0, atol=5e-3)

    # Masked path.
    mask = (jax.random.uniform(k_m, (B, N)) < 0.3).astype(jnp.int32)
    mask = mask.at[:, 0].set(0)  # keep at least one unmasked slot per row
    out_m, attn_m = attention(query, values, weight, bias, attn_mask=mask)
    jax.block_until_ready((out_m, attn_m))
    out_mr, attn_mr = attention_ref(query, values, weight, bias, attn_mask=mask)
    assert jnp.allclose(out_m, out_mr, atol=5e-2, rtol=5e-2)
    assert jnp.allclose(attn_m, attn_mr, atol=5e-2, rtol=5e-2)
    assert bool(jnp.all(jnp.where(mask != 0, attn_m, 0.0) < 1e-6))

    print("KERNEL_OK")
</pallas_src>

<mosaic_0001>
module attributes {stable_mosaic.version = 11 : i64} {
  func.func @_attention_kernel(%arg0: i32, %arg1: memref<2x32xf32, #tpu.memory_space<vmem>>, %arg2: memref<2x8x32xf32, #tpu.memory_space<vmem>>, %arg3: memref<32x32xf32, #tpu.memory_space<vmem>>, %arg4: memref<1x32xf32, #tpu.memory_space<vmem>>, %arg5: memref<2x32xf32, #tpu.memory_space<vmem>>, %arg6: memref<2x8xf32, #tpu.memory_space<vmem>>) attributes {dimension_semantics = [#tpu.dimension_semantics<parallel>], iteration_bounds = array<i64: 1>, scalar_prefetch = 0 : i64, scratch_operands = 0 : i64, tpu.core_type = #tpu.core_type<tc>, window_params = [{transform_indices = @transform_0, window_bounds = array<i64: 2, 32>}, {transform_indices = @transform_1, window_bounds = array<i64: 2, 8, 32>}, {pipeline_mode = #tpu.pipeline_mode<synchronous>, transform_indices = @transform_2, window_bounds = array<i64: 32, 32>}, {pipeline_mode = #tpu.pipeline_mode<synchronous>, transform_indices = @transform_3, window_bounds = array<i64: 1, 32>}, {transform_indices = @transform_4, window_bounds = array<i64: 2, 32>}, {transform_indices = @transform_5, window_bounds = array<i64: 2, 8>}]} {
    %c0 = arith.constant 0 : index
    %c0_0 = arith.constant 0 : index
    %0 = vector.load %arg1[%c0, %c0_0] : memref<2x32xf32, #tpu.memory_space<vmem>>, vector<2x32xf32>
    %c0_1 = arith.constant 0 : index
    %c0_2 = arith.constant 0 : index
    %1 = vector.load %arg3[%c0_1, %c0_2] : memref<32x32xf32, #tpu.memory_space<vmem>>, vector<32x32xf32>
    %cst = arith.constant dense<0.000000e+00> : vector<2x32xf32>
    %2 = tpu.matmul %0, %1, %cst {dimension_numbers = #tpu.dot_dimension_numbers<[1], [0], [0], [1], [0, 0, 1, 1], [], []>} : vector<2x32xf32>, vector<32x32xf32>, vector<2x32xf32> -> vector<2x32xf32>
    %c0_3 = arith.constant 0 : index
    %c0_4 = arith.constant 0 : index
    %3 = vector.load %arg4[%c0_3, %c0_4] : memref<1x32xf32, #tpu.memory_space<vmem>>, vector<1x32xf32>
    %4 = vector.broadcast %3 : vector<1x32xf32> to vector<2x32xf32>
    %5 = arith.addf %2, %4 : vector<2x32xf32>
    %cst_5 = arith.constant 0.176776692 : f32
    %6 = vector.broadcast %cst_5 : f32 to vector<2x32xf32>
    %7 = arith.mulf %5, %6 : vector<2x32xf32>
    %c0_6 = arith.constant 0 : index
    %c0_7 = arith.constant 0 : index
    %c0_8 = arith.constant 0 : index
    %8 = vector.load %arg2[%c0_6, %c0_7, %c0_8] : memref<2x8x32xf32, #tpu.memory_space<vmem>>, vector<2x8x32xf32>
    %9 = arith.truncf %8 : vector<2x8x32xf32> to vector<2x8x32xbf16>
    %10 = arith.truncf %7 : vector<2x32xf32> to vector<2x32xbf16>
    %11 = vector.shape_cast %10 : vector<2x32xbf16> to vector<2x1x32xbf16>
    "tpu.trace_start"() <{level = 10 : i32, message = "bqv,bnv->bqn"}> : () -> ()
    %cst_9 = arith.constant dense<0.000000e+00> : vector<2x1x8xf32>
    %12 = tpu.matmul %11, %9, %cst_9 {dimension_numbers = #tpu.dot_dimension_numbers<[2], [2], [1], [1], [0, 0, 0, 1, 1, 1], [0], [0]>} : vector<2x1x32xbf16>, vector<2x8x32xbf16>, vector<2x1x8xf32> -> vector<2x1x8xf32>
    "tpu.trace_stop"() : () -> ()
    %13 = vector.shape_cast %12 : vector<2x1x8xf32> to vector<2x8xf32>
    %cst_10 = arith.constant dense<0xFF800000> : vector<2xf32>
    %14 = vector.multi_reduction <maximumf>, %13, %cst_10 [1] : vector<2x8xf32> to vector<2xf32>
    %15 = vector.shape_cast %14 : vector<2xf32> to vector<2x1xf32>
    %16 = vector.broadcast %15 : vector<2x1xf32> to vector<2x8xf32>
    %17 = arith.subf %13, %16 : vector<2x8xf32>
    %18 = math.exp %17 : vector<2x8xf32>
    %cst_11 = arith.constant dense<0.000000e+00> : vector<2xf32>
    %19 = vector.multi_reduction <add>, %18, %cst_11 [1] : vector<2x8xf32> to vector<2xf32>
    %20 = vector.shape_cast %19 : vector<2xf32> to vector<2x1xf32>
    %21 = vector.broadcast %20 : vector<2x1xf32> to vector<2x8xf32>
    %22 = arith.divf %18, %21 : vector<2x8xf32>
    %23 = arith.truncf %22 : vector<2x8xf32> to vector<2x8xbf16>
    %24 = vector.shape_cast %23 : vector<2x8xbf16> to vector<2x1x8xbf16>
    "tpu.trace_start"() <{level = 10 : i32, message = "bqn,bnv->bqv"}> : () -> ()
    %cst_12 = arith.constant dense<0.000000e+00> : vector<2x1x32xf32>
    %25 = tpu.matmul %24, %9, %cst_12 {dimension_numbers = #tpu.dot_dimension_numbers<[2], [1], [1], [2], [0, 0, 0, 1, 1, 2], [0], [0]>} : vector<2x1x8xbf16>, vector<2x8x32xbf16>, vector<2x1x32xf32> -> vector<2x1x32xf32>
    "tpu.trace_stop"() : () -> ()
    %26 = vector.shape_cast %25 : vector<2x1x32xf32> to vector<2x32xf32>
    %c0_13 = arith.constant 0 : index
    %c0_14 = arith.constant 0 : index
    %27 = vector.load %arg6[%c0_13, %c0_14] : memref<2x8xf32, #tpu.memory_space<vmem>>, vector<2x8xf32>
    tpu.vector_store %arg6[%c0_13, %c0_14], %22 {strides = array<i32>} : memref<2x8xf32, #tpu.memory_space<vmem>>, vector<2x8xf32>,
    %c0_15 = arith.constant 0 : index
    %c0_16 = arith.constant 0 : index
    %28 = vector.load %arg5[%c0_15, %c0_16] : memref<2x32xf32, #tpu.memory_space<vmem>>, vector<2x32xf32>
    tpu.vector_store %arg5[%c0_15, %c0_16], %26 {strides = array<i32>} : memref<2x32xf32, #tpu.memory_space<vmem>>, vector<2x32xf32>,
    return
  }
  func.func @transform_0(%arg0: i32) -> (i32, i32) {
    %c0_i32 = arith.constant 0 : i32
    %c0_i32_0 = arith.constant 0 : i32
    return %arg0, %c0_i32 : i32, i32
  }
  func.func @transform_1(%arg0: i32) -> (i32, i32, i32) {
    %c0_i32 = arith.constant 0 : i32
    %c0_i32_0 = arith.constant 0 : i32
    %c0_i32_1 = arith.constant 0 : i32
    return %arg0, %c0_i32, %c0_i32_0 : i32, i32, i32
  }
  func.func @transform_2(%arg0: i32) -> (i32, i32) {
    %c0_i32 = arith.constant 0 : i32
    %c0_i32_0 = arith.constant 0 : i32
    %c0_i32_1 = arith.constant 0 : i32
    return %c0_i32, %c0_i32_0 : i32, i32
  }
  func.func @transform_3(%arg0: i32) -> (i32, i32) {
    %c0_i32 = arith.constant 0 : i32
    %c0_i32_0 = arith.constant 0 : i32
    %c0_i32_1 = arith.constant 0 : i32
    return %c0_i32, %c0_i32_0 : i32, i32
  }
  func.func @transform_4(%arg0: i32) -> (i32, i32) {
    %c0_i32 = arith.constant 0 : i32
    %c0_i32_0 = arith.constant 0 : i32
    return %arg0, %c0_i32 : i32, i32
  }
  func.func @transform_5(%arg0: i32) -> (i32, i32) {
    %c0_i32 = arith.constant 0 : i32
    %c0_i32_0 = arith.constant 0 : i32
    return %arg0, %c0_i32 : i32, i32
  }
}

</mosaic_0001>

<llo_original>
// kernel: tpu_custom_call.1
$region0: #{tpu_custom_call.1}
  #allocation0 [shape = 'u32[]', space=smem, size = 0x4, offset = 0x4, fixed_abs, tag = 'smem constant byte address 0x4 - core index']
  #allocation1 [shape = 'u32[144,128]{1,0:T(1,128)}', space=vmem, size = 0x12000, scoped, tag = 'internal scratch']
  %s0 = inlined_call_operand.hbm [shape: f32[2,32], index: 0, kind: input, shape index: {}]
  %s1 = inlined_call_operand.hbm [shape: f32[2,8,32], index: 1, kind: input, shape index: {}]
  %s2 = inlined_call_operand.hbm [shape: f32[32,32], index: 2, kind: input, shape index: {}]
  %s3 = inlined_call_operand.vmem [shape: f32[1,32], index: 3, kind: input, shape index: {}]
  %s4 = inlined_call_operand.hbm [shape: f32[2,32], index: 4, kind: output, shape index: {0}]
  %s5 = inlined_call_operand.hbm [shape: f32[2,8], index: 5, kind: output, shape index: {1}]
  %6 = xla_tuple %s4, %s5
  %s7 = sld [smem:[#allocation0]]
  $region46: #{tpu_custom_call.1} parent=0
    _
  %s9 = ssub.s32 1, %s7
  %s10 = scalar_select 0, %s9, %s7
  $region1: #{tpu_custom_call.1} parent=0
    #allocation2 [shape = 'u8[1024]{0}', space=vmem, size = 0x400, scoped, tag = 'input window, operand 0, single buffered']
    #allocation3 [shape = 's32[1]{0}', space=sflag, size = 0x4, scoped, tag = 'scoped memory for tpu_custom_call.1']
    #allocation4 [shape = 's32[1]{0}', space=sflag, size = 0x4, scoped, tag = 'scoped memory for tpu_custom_call.1']
    #allocation5 [shape = 'u8[8192]{0}', space=vmem, size = 0x2000, scoped, tag = 'input window, operand 1, single buffered']
    #allocation6 [shape = 's32[1]{0}', space=sflag, size = 0x4, scoped, tag = 'scoped memory for tpu_custom_call.1']
    #allocation7 [shape = 'u8[16384]{0}', space=vmem, size = 0x4000, scoped, tag = 'input window, operand 2, single buffered']
    #allocation8 [shape = 'u8[1024]{0}', space=vmem, size = 0x400, scoped, tag = 'output window, operand 0, single buffered']
    #allocation9 [shape = 'u8[1024]{0}', space=vmem, size = 0x400, scoped, tag = 'output window, operand 1, single buffered']
    #allocation10 [shape = 's32[1]{0}', space=sflag, size = 0x4, scoped, tag = 'scoped memory for tpu_custom_call.1']
    %11 = vsyncpa [#allocation3], 0
    %12 = vsyncpa [#allocation6], 0
    %13 = vsyncpa [#allocation4], 0
    %14 = vsyncpa [#allocation10], 0
    // Predicated region
    $region2: #{tpu_custom_call.1} parent=1 // pred_check
      _
    $region3: #{tpu_custom_call.1} parent=1 // pred_check_branch
      %16 = sbr.rel (0) target = $region5
    $region4: #{tpu_custom_call.1} parent=1 // pred_region
      %s18 = ssub.s32 32, 32
      %19 = vsyncadd [#allocation3], %s18
      %s21 = sshll.u32 [#allocation2], 4
      %s22 = int_to_ptr.vmem [resolvable:$true] %s21
      %24 = dma.hbm_to_vmem [thread:$0]  %s0, 32, %s22, [#allocation3]
    $region5: #{tpu_custom_call.1} parent=1 // pred_fallthru
      _
    // Predicated region
    $region6: #{tpu_custom_call.1} parent=1 // pred_check
      _
    $region7: #{tpu_custom_call.1} parent=1 // pred_check_branch
      %26 = sbr.rel (0) target = $region9
    $region8: #{tpu_custom_call.1} parent=1 // pred_region
      %s28 = ssub.s32 256, 256
      %29 = vsyncadd [#allocation6], %s28
      %s30 = sshll.u32 [#allocation5], 4
      %s31 = int_to_ptr.vmem [resolvable:$true] %s30
      %36 = dma.hbm_to_vmem [thread:$0]  %s1, 256, %s31, [#allocation6], 128, 128, 8
    $region9: #{tpu_custom_call.1} parent=1 // pred_fallthru
      _
    // Predicated region
    $region10: #{tpu_custom_call.1} parent=1 // pred_check
      _
    $region11: #{tpu_custom_call.1} parent=1 // pred_check_branch
      %38 = sbr.rel (0) target = $region13
    $region12: #{tpu_custom_call.1} parent=1 // pred_region
      %s40 = ssub.s32 512, 512
      %41 = vsyncadd [#allocation6], %s40
      %s42 = sshll.u32 [#allocation7], 4
      %s43 = int_to_ptr.vmem [resolvable:$true] %s42
      %48 = dma.hbm_to_vmem [thread:$0]  %s2, 512, %s43, [#allocation6], 128, 128, 8
    $region13: #{tpu_custom_call.1} parent=1 // pred_fallthru
      _
    // Predicated region
    $region14: #{tpu_custom_call.1} parent=1 // pred_check
      _
    $region15: #{tpu_custom_call.1} parent=1 // pred_check_branch
      %50 = sbr.rel (0) target = $region17
    $region16: #{tpu_custom_call.1} parent=1 // pred_region
      _
    $region17: #{tpu_custom_call.1} parent=1 // pred_fallthru
      _
    // Predicated region
    $region18: #{tpu_custom_call.1} parent=1 // pred_check
      _
    $region19: #{tpu_custom_call.1} parent=1 // pred_check_branch
      %52 = sbr.rel (0) target = $region21
    $region20: #{tpu_custom_call.1} parent=1 // pred_region
      %53 = dma.done [#allocation3], 32
    $region21: #{tpu_custom_call.1} parent=1 // pred_fallthru
      _
    // Predicated region
    $region22: #{tpu_custom_call.1} parent=1 // pred_check
      _
    $region23: #{tpu_custom_call.1} parent=1 // pred_check_branch
      %55 = sbr.rel (0) target = $region25
    $region24: #{tpu_custom_call.1} parent=1 // pred_region
      %56 = dma.done [#allocation6], 256
    $region25: #{tpu_custom_call.1} parent=1 // pred_fallthru
      _
    // Predicated region
    $region26: #{tpu_custom_call.1} parent=1 // pred_check
      _
    $region27: #{tpu_custom_call.1} parent=1 // pred_check_branch
      %58 = sbr.rel (0) target = $region29
    $region28: #{tpu_custom_call.1} parent=1 // pred_region
      %59 = dma.done [#allocation6], 512
    $region29: #{tpu_custom_call.1} parent=1 // pred_fallthru
      _
    %v61 = vld [vmem:[#allocation2] sm:$0x3]
    %v62 = vld [vmem:[#allocation7] sm:$0xff]
    %v63 = vld [vmem:[#allocation7 + $0x8] sm:$0xff]
    %v64 = vld [vmem:[#allocation7 + $0x10] sm:$0xff]
    %v65 = vld [vmem:[#allocation7 + $0x18] sm:$0xff]
    %v66 = vld [vmem:[%s3] sm:$0x1]
    %v68 = vlaneseq
    %v69 = vshrl.u32 %v68, 7
    %v70 = vsub.s32 0, %v69
    %v71 = vrot.slane %v66, %v70
    %vm73 = vcmask 261120
    %v75 = vsel %vm73, %v61, 0
    %77 = vmatprep.subr.mxu0 0.0
    %78 = vmatpush1.msra.mxu0 0.0
    %79 = vmatprep.subr.mxu0 0.0
    %80 = vmatpush1.msra.mxu0 0.0
    %81 = vmatprep.subr.mxu0 0.0
    %82 = vmatpush1.msra.mxu0 0.0
    %83 = vmatprep.subr.mxu0 0.0
    %84 = vmatpush1.msra.mxu0 0.0
    %85 = vmatprep.subr.mxu0 0.0
    %86 = vmatpush1.msra.mxu0 0.0
    %87 = vmatprep.subr.mxu0 0.0
    %88 = vmatpush1.msra.mxu0 0.0
    %89 = vmatprep.subr.mxu0 0.0
    %90 = vmatpush1.msra.mxu0 0.0
    %91 = vmatprep.subr.mxu0 0.0
    %92 = vmatpush1.msra.mxu0 0.0
    %93 = vmatprep.subr.mxu0 0.0
    %94 = vmatpush1.msra.mxu0 0.0
    %95 = vmatprep.subr.mxu0 0.0
    %96 = vmatpush1.msra.mxu0 0.0
    %97 = vmatprep.subr.mxu0 0.0
    %98 = vmatpush1.msra.mxu0 0.0
    %99 = vmatprep.subr.mxu0 0.0
    %100 = vmatpush1.msra.mxu0 0.0
    %101 = vmatprep.subr.mxu0 0.0
    %102 = vmatpush1.msra.mxu0 %v65
    %103 = vmatprep.subr.mxu0 0.0
    %104 = vmatpush1.msra.mxu0 %v64
    %105 = vmatprep.subr.mxu0 0.0
    %106 = vmatpush1.msra.mxu0 %v63
    %107 = vmatprep.subr.mxu0 0.0
    %108 = vmatpush1.msra.mxu0 %v62
    %109 = vmatprep.subr.mxu0 0.0
    %110 = vmatpush2.msra.mxu0 0.0
    %111 = vmatprep.subr.mxu0 0.0
    %112 = vmatpush2.msra.mxu0 0.0
    %113 = vmatprep.subr.mxu0 0.0
    %114 = vmatpush2.msra.mxu0 0.0
    %115 = vmatprep.subr.mxu0 0.0
    %116 = vmatpush2.msra.mxu0 0.0
    %117 = vmatprep.subr.mxu0 0.0
    %118 = vmatpush2.msra.mxu0 0.0
    %119 = vmatprep.subr.mxu0 0.0
    %120 = vmatpush2.msra.mxu0 0.0
    %121 = vmatprep.subr.mxu0 0.0
    %122 = vmatpush2.msra.mxu0 0.0
    %123 = vmatprep.subr.mxu0 0.0
    %124 = vmatpush2.msra.mxu0 0.0
    %125 = vmatprep.subr.mxu0 0.0
    %126 = vmatpush2.msra.mxu0 0.0
    %127 = vmatprep.subr.mxu0 0.0
    %128 = vmatpush2.msra.mxu0 0.0
    %129 = vmatprep.subr.mxu0 0.0
    %130 = vmatpush2.msra.mxu0 0.0
    %131 = vmatprep.subr.mxu0 0.0
    %132 = vmatpush2.msra.mxu0 0.0
    %133 = vmatprep.subr.mxu0 0.0
    %134 = vmatpush2.msra.mxu0 0.0
    %135 = vmatprep.subr.mxu0 0.0
    %136 = vmatpush2.msra.mxu0 0.0
    %137 = vmatprep.subr.mxu0 0.0
    %138 = vmatpush2.msra.mxu0 0.0
    %139 = vmatprep.subr.mxu0 0.0
    %140 = vmatpush2.msra.mxu0 0.0
    %141 = vmatprep.mubr.f32.mxu0 0.0
    %142 = vmatmul.mubr.f32.gmra.mxu0 %v75
    %v143 = vpop.f32.mrf.mxu0
    %v144 = vadd.f32 %v71, %v143
    %v145 = vpop.f32.mrf.mxu0
    %146 = vdwg.mxu0
    %v147 = vmul.f32 %v144, 0.17677669
    %v148 = vld [vmem:[#allocation5] sm:$0xff]
    %v149 = vld [vmem:[#allocation5 + $0x8] sm:$0xff]
    %v150 = vpack.c.bf16 %v148, %v148
    %v151 = vpack.c.bf16 %v149, %v149
    %v152 = vpack.c.bf16 %v147, %v147
    %v155 = vunpack.c.l.s4 1966171168
    %v156 = vunpack.c.0.s8 %v155
    %v157 = vlaneseq
    %v158 = vshrl.u32 %v157, 7
    %v159 = vsub.s32 %v156, %v158
    %v160 = vrot.slane %v152, %v159
    %v162 = vunpack.c.l.s4 1966171168
    %v163 = vunpack.c.0.s8 %v162
    %v164 = vlaneseq
    %v165 = vshrl.u32 %v164, 7
    %v166 = vsub.s32 %v163, %v165
    %v167 = vrot.slane %v160, %v166
    %v168 = vunpack.i.l.s16 %v167
    %v169 = vunpack.i.h.s16 %v167
    %v170 = vpack.i.b16 %v168, %v168
    %v171 = vlaneseq
    %v172 = vshrl.u32 %v171, 7
    %v173 = vsub.s32 0, %v172
    %v174 = vrot.slane %v170, %v173
    %v176 = vsel %vm73, %v174, 0
    %v179 = vsel %vm73, %v150, 0
    %181 = vmatprep.subr.bf16.mxu0 0
    %182 = vmatpush1.bf16.xpose.msra.mxu0 0
    %183 = vmatprep.subr.bf16.mxu0 0
    %184 = vmatpush1.bf16.xpose.msra.mxu0 0
    %185 = vmatprep.subr.bf16.mxu0 0
    %186 = vmatpush1.bf16.xpose.msra.mxu0 0
    %187 = vmatprep.subr.bf16.mxu0 0
    %188 = vmatpush1.bf16.xpose.msra.mxu0 0
    %189 = vmatprep.subr.bf16.mxu0 0
    %190 = vmatpush1.bf16.xpose.msra.mxu0 0
    %191 = vmatprep.subr.bf16.mxu0 0
    %192 = vmatpush1.bf16.xpose.msra.mxu0 0
    %193 = vmatprep.subr.bf16.mxu0 0
    %194 = vmatpush1.bf16.xpose.msra.mxu0 0
    %195 = vmatprep.subr.bf16.mxu0 0
    %196 = vmatpush1.bf16.xpose.msra.mxu0 %v179
    %197 = vmatprep.subr.bf16.mxu0 0
    %198 = vmatpush2.bf16.xpose.msra.mxu0 0
    %199 = vmatprep.subr.bf16.mxu0 0
    %200 = vmatpush2.bf16.xpose.msra.mxu0 0
    %201 = vmatprep.subr.bf16.mxu0 0
    %202 = vmatpush2.bf16.xpose.msra.mxu0 0
    %203 = vmatprep.subr.bf16.mxu0 0
    %204 = vmatpush2.bf16.xpose.msra.mxu0 0
    %205 = vmatprep.subr.bf16.mxu0 0
    %206 = vmatpush2.bf16.xpose.msra.mxu0 0
    %207 = vmatprep.subr.bf16.mxu0 0
    %208 = vmatpush2.bf16.xpose.msra.mxu0 0
    %209 = vmatprep.subr.bf16.mxu0 0
    %210 = vmatpush2.bf16.xpose.msra.mxu0 0
    %211 = vmatprep.subr.bf16.mxu0 0
    %212 = vmatpush2.bf16.xpose.msra.mxu0 0
    %213 = vmatprep.mubr.bf16.mxu0 0
    %214 = vmatmul.mubr.bf16.gmra.mxu0 %v176
    %v215 = vpop.f32.mrf.mxu0
    %v216 = vadd.f32 0.0, %v215
    %v217 = vpop.f32.mrf.mxu0
    %v218 = vpop.f32.mrf.mxu0
    %v219 = vpop.f32.mrf.mxu0
    %220 = vdwg.mxu0
    %v221 = vpack.i.b16 %v169, %v169
    %v222 = vlaneseq
    %v223 = vshrl.u32 %v222, 7
    %v224 = vsub.s32 0, %v223
    %v225 = vrot.slane %v221, %v224
    %v227 = vsel %vm73, %v225, 0
    %v230 = vsel %vm73, %v151, 0
    %232 = vmatprep.subr.bf16.mxu0 0
    %233 = vmatpush1.bf16.xpose.msra.mxu0 0
    %234 = vmatprep.subr.bf16.mxu0 0
    %235 = vmatpush1.bf16.xpose.msra.mxu0 0
    %236 = vmatprep.subr.bf16.mxu0 0
    %237 = vmatpush1.bf16.xpose.msra.mxu0 0
    %238 = vmatprep.subr.bf16.mxu0 0
    %239 = vmatpush1.bf16.xpose.msra.mxu0 0
    %240 = vmatprep.subr.bf16.mxu0 0
    %241 = vmatpush1.bf16.xpose.msra.mxu0 0
    %242 = vmatprep.subr.bf16.mxu0 0
    %243 = vmatpush1.bf16.xpose.msra.mxu0 0
    %244 = vmatprep.subr.bf16.mxu0 0
    %245 = vmatpush1.bf16.xpose.msra.mxu0 0
    %246 = vmatprep.subr.bf16.mxu0 0
    %247 = vmatpush1.bf16.xpose.msra.mxu0 %v230
    %248 = vmatprep.subr.bf16.mxu0 0
    %249 = vmatpush2.bf16.xpose.msra.mxu0 0
    %250 = vmatprep.subr.bf16.mxu0 0
    %251 = vmatpush2.bf16.xpose.msra.mxu0 0
    %252 = vmatprep.subr.bf16.mxu0 0
    %253 = vmatpush2.bf16.xpose.msra.mxu0 0
    %254 = vmatprep.subr.bf16.mxu0 0
    %255 = vmatpush2.bf16.xpose.msra.mxu0 0
    %256 = vmatprep.subr.bf16.mxu0 0
    %257 = vmatpush2.bf16.xpose.msra.mxu0 0
    %258 = vmatprep.subr.bf16.mxu0 0
    %259 = vmatpush2.bf16.xpose.msra.mxu0 0
    %260 = vmatprep.subr.bf16.mxu0 0
    %261 = vmatpush2.bf16.xpose.msra.mxu0 0
    %262 = vmatprep.subr.bf16.mxu0 0
    %263 = vmatpush2.bf16.xpose.msra.mxu0 0
    %264 = vmatprep.mubr.bf16.mxu0 0
    %265 = vmatmul.mubr.bf16.gmra.mxu0 %v227
    %v266 = vpop.f32.mrf.mxu0
    %v267 = vadd.f32 0.0, %v266
    %v268 = vpop.f32.mrf.mxu0
    %v269 = vpop.f32.mrf.mxu0
    %v270 = vpop.f32.mrf.mxu0
    %271 = vdwg.mxu0
    %v274 = vrot.slane %v267, 7
    %vm275 = vcmask 1041409
    %v276 = vsel %vm275, %v274, %v216
    %vm278 = vcmask 58368
    %v279 = vsel %vm278, %v276, -inf
    %280 = vmax.xlane.f32.xlu0 %v279
    %v281 = vpop.xlane.xlu0 %280
    %v283 = vrot.slane %v281, 1
    %v286 = vsub.f32 %v216, %v281
    %v287 = vsub.f32 %v267, %v283
    %v288 = vmul.f32 %v286, 1.442695
    %v289 = vpow.pop %v288
    %v290 = vmul.f32 %v287, 1.442695
    %v291 = vpow.pop %v290
    %v294 = vrot.slane %v291, 7
    %v295 = vsel %vm275, %v294, %v289
    %v297 = vsel %vm278, %v295, 0.0
    %298 = vadd.xlane.f32.xlu0 %v297
    %v299 = vpop.xlane.xlu0 %298
    %v301 = vrot.slane %v299, 1
    %v304 = vrcp.pop %v299
    %v305 = vmul.f32 %v289, %v304
    %v306 = vrcp.pop %v301
    %v307 = vmul.f32 %v291, %v306
    %v308 = vpack.c.bf16 %v305, %v305
    %v309 = vpack.c.bf16 %v307, %v307
    %vm310 = vcmask 64512
    %v312 = vsel %vm310, %v308, 0
    %vm314 = vcmask 1043456
    %v315 = vsel %vm314, %v150, 0
    %317 = vmatprep.subr.bf16.mxu0 0
    %318 = vmatpush1.bf16.msra.mxu0 0
    %319 = vmatprep.subr.bf16.mxu0 0
    %320 = vmatpush1.bf16.msra.mxu0 0
    %321 = vmatprep.subr.bf16.mxu0 0
    %322 = vmatpush1.bf16.msra.mxu0 0
    %323 = vmatprep.subr.bf16.mxu0 0
    %324 = vmatpush1.bf16.msra.mxu0 0
    %325 = vmatprep.subr.bf16.mxu0 0
    %326 = vmatpush1.bf16.msra.mxu0 0
    %327 = vmatprep.subr.bf16.mxu0 0
    %328 = vmatpush1.bf16.msra.mxu0 0
    %329 = vmatprep.subr.bf16.mxu0 0
    %330 = vmatpush1.bf16.msra.mxu0 0
    %331 = vmatprep.subr.bf16.mxu0 0
    %332 = vmatpush1.bf16.msra.mxu0 %v315
    %333 = vmatprep.subr.bf16.mxu0 0
    %334 = vmatpush2.bf16.msra.mxu0 0
    %335 = vmatprep.subr.bf16.mxu0 0
    %336 = vmatpush2.bf16.msra.mxu0 0
    %337 = vmatprep.subr.bf16.mxu0 0
    %338 = vmatpush2.bf16.msra.mxu0 0
    %339 = vmatprep.subr.bf16.mxu0 0
    %340 = vmatpush2.bf16.msra.mxu0 0
    %341 = vmatprep.subr.bf16.mxu0 0
    %342 = vmatpush2.bf16.msra.mxu0 0
    %343 = vmatprep.subr.bf16.mxu0 0
    %344 = vmatpush2.bf16.msra.mxu0 0
    %345 = vmatprep.subr.bf16.mxu0 0
    %346 = vmatpush2.bf16.msra.mxu0 0
    %347 = vmatprep.subr.bf16.mxu0 0
    %348 = vmatpush2.bf16.msra.mxu0 0
    %349 = vmatprep.mubr.bf16.mxu0 0
    %350 = vmatmul.mubr.bf16.gmra.mxu0 %v312
    %v351 = vpop.f32.mrf.mxu0
    %v352 = vadd.f32 0.0, %v351
    %v353 = vpop.f32.mrf.mxu0
    %v354 = vpop.f32.mrf.mxu0
    %v355 = vpop.f32.mrf.mxu0
    %356 = vdwg.mxu0
    %v358 = vsel %vm310, %v309, 0
    %v360 = vsel %vm314, %v151, 0
    %362 = vmatprep.subr.bf16.mxu0 0
    %363 = vmatpush1.bf16.msra.mxu0 0
    %364 = vmatprep.subr.bf16.mxu0 0
    %365 = vmatpush1.bf16.msra.mxu0 0
    %366 = vmatprep.subr.bf16.mxu0 0
    %367 = vmatpush1.bf16.msra.mxu0 0
    %368 = vmatprep.subr.bf16.mxu0 0
    %369 = vmatpush1.bf16.msra.mxu0 0
    %370 = vmatprep.subr.bf16.mxu0 0
    %371 = vmatpush1.bf16.msra.mxu0 0
    %372 = vmatprep.subr.bf16.mxu0 0
    %373 = vmatpush1.bf16.msra.mxu0 0
    %374 = vmatprep.subr.bf16.mxu0 0
    %375 = vmatpush1.bf16.msra.mxu0 0
    %376 = vmatprep.subr.bf16.mxu0 0
    %377 = vmatpush1.bf16.msra.mxu0 %v360
    %378 = vmatprep.subr.bf16.mxu0 0
    %379 = vmatpush2.bf16.msra.mxu0 0
    %380 = vmatprep.subr.bf16.mxu0 0
    %381 = vmatpush2.bf16.msra.mxu0 0
    %382 = vmatprep.subr.bf16.mxu0 0
    %383 = vmatpush2.bf16.msra.mxu0 0
    %384 = vmatprep.subr.bf16.mxu0 0
    %385 = vmatpush2.bf16.msra.mxu0 0
    %386 = vmatprep.subr.bf16.mxu0 0
    %387 = vmatpush2.bf16.msra.mxu0 0
    %388 = vmatprep.subr.bf16.mxu0 0
    %389 = vmatpush2.bf16.msra.mxu0 0
    %390 = vmatprep.subr.bf16.mxu0 0
    %391 = vmatpush2.bf16.msra.mxu0 0
    %392 = vmatprep.subr.bf16.mxu0 0
    %393 = vmatpush2.bf16.msra.mxu0 0
    %394 = vmatprep.mubr.bf16.mxu0 0
    %395 = vmatmul.mubr.bf16.gmra.mxu0 %v358
    %v396 = vpop.f32.mrf.mxu0
    %v397 = vadd.f32 0.0, %v396
    %v398 = vpop.f32.mrf.mxu0
    %v399 = vpop.f32.mrf.mxu0
    %v400 = vpop.f32.mrf.mxu0
    %401 = vdwg.mxu0
    %v404 = vrot.slane %v307, 7
    %v405 = vsel %vm275, %v404, %v305
    %407 = vst.msk [vmem:[#allocation9] sm:$0x3] %vm278, %v405
    %v410 = vrot.slane %v397, 7
    %v411 = vsel %vm275, %v410, %v352
    %vm413 = vcmask 254976
    %414 = vst.msk [vmem:[#allocation8] sm:$0x3] %vm413, %v411
    // Predicated region
    $region30: #{tpu_custom_call.1} parent=1 // pred_check
      _
    $region31: #{tpu_custom_call.1} parent=1 // pred_check_branch
      %416 = sbr.rel (0) target = $region33
    $region32: #{tpu_custom_call.1} parent=1 // pred_region
      %s418 = ssub.s32 32, 32
      %419 = vsyncadd [#allocation4], %s418
      %s421 = sshll.u32 [#allocation8], 4
      %s422 = int_to_ptr.vmem [resolvable:$true] %s421
      %424 = dma.vmem_to_hbm [thread:$0]  %s422, 32, %s4, [#allocation4]
    $region33: #{tpu_custom_call.1} parent=1 // pred_fallthru
      _
    // Predicated region
    $region34: #{tpu_custom_call.1} parent=1 // pred_check
      _
    $region35: #{tpu_custom_call.1} parent=1 // pred_check_branch
      %426 = sbr.rel (0) target = $region37
    $region36: #{tpu_custom_call.1} parent=1 // pred_region
      %s428 = ssub.s32 32, 32
      %429 = vsyncadd [#allocation10], %s428
      %s431 = sshll.u32 [#allocation9], 4
      %s432 = int_to_ptr.vmem [resolvable:$true] %s431
      %434 = dma.vmem_to_hbm [thread:$0]  %s432, 32, %s5, [#allocation10]
    $region37: #{tpu_custom_call.1} parent=1 // pred_fallthru
      _
    // Predicated region
    $region38: #{tpu_custom_call.1} parent=1 // pred_check
      _
    $region39: #{tpu_custom_call.1} parent=1 // pred_check_branch
      %436 = sbr.rel (0) target = $region41
    $region40: #{tpu_custom_call.1} parent=1 // pred_region
      %437 = dma.done [#allocation4], 32
    $region41: #{tpu_custom_call.1} parent=1 // pred_fallthru
      _
    // Predicated region
    $region42: #{tpu_custom_call.1} parent=1 // pred_check
      _
    $region43: #{tpu_custom_call.1} parent=1 // pred_check_branch
      %439 = sbr.rel (0) target = $region45
    $region44: #{tpu_custom_call.1} parent=1 // pred_region
      %440 = dma.done [#allocation10], 32
    $region45: #{tpu_custom_call.1} parent=1 // pred_fallthru
      _
    %441 = vsyncpa [#allocation3], 1
    %442 = vsyncpa [#allocation6], 1
    %443 = vsyncpa [#allocation4], 1
    %444 = vsyncpa [#allocation10], 1

</llo_original>
